<compile_context>
chip_gen: v5e
topology: v5e:2x2
jax: 0.10.0
libtpu: 0.0.40
codegen_flags: <defaults>
</compile_context>

<pallas_src>
import math

import jax
import jax.numpy as jnp
from jax.experimental import pallas as pl
from jax.experimental.pallas import tpu as pltpu


def _round_up(x, m):
    return ((x + m - 1) // m) * m


def _make_mlp_kernel(num_hidden, layer_norm, eps=1e-6):
    """Build a fused MLP kernel for one batch tile.

    Ref order: x, w0, b0, ..., w{n-1}, b{n-1}, wl, bl, [ln_c0 .. ln_c{n-2}], out
    Hidden activation = ReLU, output activation = identity.
    """
    n_wb = 2 * (num_hidden + 1)
    n_ln = (num_hidden - 1) if layer_norm else 0

    def kernel(*refs):
        x_ref = refs[0]
        wb = refs[1:1 + n_wb]
        ln = refs[1 + n_wb:1 + n_wb + n_ln]
        out_ref = refs[-1]

        cdt = wb[0].dtype  # MXU input dtype (f32 or bf16); accumulation is f32
        h = x_ref[...].astype(cdt)
        for i in range(num_hidden):
            h = (jnp.dot(h, wb[2 * i][...], preferred_element_type=jnp.float32)
                 + wb[2 * i + 1][...])
            if layer_norm and i < num_hidden - 1:
                n = h.shape[-1]
                mean = jnp.mean(h, axis=-1, keepdims=True)
                d = h - mean
                # PyTorch x.std(-1): unbiased (N-1); module adds eps to std.
                std = jnp.sqrt(jnp.sum(d * d, axis=-1, keepdims=True) / (n - 1))
                h = d / (std + eps) + ln[i][...]        # center=True, scale=False
            h = jnp.maximum(h, 0.0).astype(cdt)
        out = (jnp.dot(h, wb[-2][...], preferred_element_type=jnp.float32)
               + wb[-1][...])
        out_ref[...] = out.astype(out_ref.dtype)

    return kernel


def mlp_forward(x, params, *, layer_norm=False, tm=256, compute_dtype=jnp.float32):
    """x: (B, input_size) f32. params: transposed weights (in, out), 2-D biases.

    tm: batch-tile rows per grid step. compute_dtype: dtype of MXU inputs
    (weights / activations); biases, LN params and accumulation stay f32.
    """
    B, in_size = x.shape
    num_hidden = len([k for k in params if k.startswith("w") and k != "wl"])
    ws = [params[f"w{i}"] for i in range(num_hidden)] + [params["wl"]]
    bs = [params[f"b{i}"] for i in range(num_hidden)] + [params["bl"]]
    ln_cs = ([params[f"ln_c{i}"] for i in range(num_hidden - 1)]
             if layer_norm else [])
    out_size = ws[-1].shape[1]

    # --- lane-dense output: pad last layer to a 128-lane multiple so the final
    # store is an unmasked full-lane vst instead of a masked partial store.
    out_pad = _round_up(out_size, 128)
    if out_pad != out_size:
        ws[-1] = jnp.pad(ws[-1], ((0, 0), (0, out_pad - out_size)))
        bs[-1] = jnp.pad(bs[-1], ((0, 0), (0, out_pad - out_size)))

    # --- batch tiling: sublane-aligned tile, never over-pad tiny batches.
    tm = max(8, min(tm, _round_up(B, 8)))
    b_pad = _round_up(B, tm)
    if b_pad != B:
        x = jnp.pad(x, ((0, b_pad - B), (0, 0)))  # zero-pad tail rows (no OOB tiles)

    # --- dtypes: MXU inputs in compute_dtype; biases / LN centers / accum f32.
    x = x.astype(compute_dtype)
    ws = [w.astype(compute_dtype) for w in ws]
    bs = [b.astype(jnp.float32) for b in bs]
    ln_cs = [c.astype(jnp.float32) for c in ln_cs]

    inputs = [x]
    for w, b in zip(ws, bs):
        inputs += [w, b]
    inputs += ln_cs

    def resident_spec(arr):
        # Same block index every grid step -> stays VMEM-resident, no re-DMA.
        return pl.BlockSpec(arr.shape, lambda i, _nd=arr.ndim: (0,) * _nd)

    in_specs = [pl.BlockSpec((tm, in_size), lambda i: (i, 0))]  # streamed per tile
    in_specs += [resident_spec(a) for a in inputs[1:]]

    grid = (b_pad // tm,)

    # --- explicit VMEM budget: resident params + double-buffered x/out tiles +
    # f32 intermediates (2x margin), clamped under v7x's 64 MiB physical VMEM.
    isz = jnp.dtype(compute_dtype).itemsize
    resident = (sum(w.size for w in ws) * isz
                + sum(b.size for b in bs) * 4
                + sum(c.size for c in ln_cs) * 4)
    streamed = 2 * 2 * (tm * in_size * isz + tm * out_pad * 4)
    interm = 3 * tm * max(w.shape[1] for w in ws) * 4
    vmem_limit = int(min(max(2 * (resident + streamed + interm), 16 << 20),
                         60 << 20))

    kernel = _make_mlp_kernel(num_hidden, layer_norm)

    out = pl.pallas_call(
        kernel,
        out_shape=jax.ShapeDtypeStruct((b_pad, out_pad), jnp.float32),
        grid=grid,
        in_specs=in_specs,
        out_specs=pl.BlockSpec((tm, out_pad), lambda i: (i, 0)),
        compiler_params=pltpu.CompilerParams(
            dimension_semantics=("parallel",),   # v7x: shard batch grid over 2 TCs
            vmem_limit_bytes=vmem_limit,
        ),
    )(*inputs)

    return out[:B, :out_size]


def init_mlp_params(key, input_size, hidden_sizes, output_size, init_w=0.003,
                    b_init_value=0.0, layer_norm=False):
    """Mirrors the PyTorch module init:
       - hidden fc weights: fanin_init (uniform +/- 1/sqrt(fan_in)), bias = b_init_value
       - last fc weight: uniform(-init_w, init_w), bias = 0
       - LayerNorm center params: zeros (scale disabled)
       Weights stored transposed: (in, out)."""
    params = {}
    in_size = input_size
    sizes = list(hidden_sizes)
    keys = jax.random.split(key, len(sizes) + 1)
    for i, next_size in enumerate(sizes):
        bound = 1.0 / math.sqrt(in_size)
        params[f"w{i}"] = jax.random.uniform(keys[i], (in_size, next_size),
                                             minval=-bound, maxval=bound,
                                             dtype=jnp.float32)
        params[f"b{i}"] = jnp.full((1, next_size), b_init_value, dtype=jnp.float32)
        if layer_norm and i < len(sizes) - 1:
            params[f"ln_c{i}"] = jnp.zeros((1, next_size), dtype=jnp.float32)
        in_size = next_size
    params["wl"] = jax.random.uniform(keys[-1], (in_size, output_size),
                                      minval=-init_w, maxval=init_w,
                                      dtype=jnp.float32)
    params["bl"] = jnp.zeros((1, output_size), dtype=jnp.float32)
    return params


def mlp_reference(x, params, *, layer_norm=False, eps=1e-6):
    num_hidden = len([k for k in params if k.startswith("w") and k != "wl"])
    h = x
    for i in range(num_hidden):
        h = h @ params[f"w{i}"] + params[f"b{i}"]
        if layer_norm and i < num_hidden - 1:
            mean = jnp.mean(h, axis=-1, keepdims=True)
            std = jnp.std(h, axis=-1, keepdims=True, ddof=1)   # torch unbiased std
            h = (h - mean) / (std + eps) + params[f"ln_c{i}"]
        h = jnp.maximum(h, 0.0)
    return h @ params["wl"] + params["bl"]


if __name__ == "__main__":
    key = jax.random.PRNGKey(0)
    k_x, k_p, k_x2, k_p3, k_x3, k_ln = jax.random.split(key, 6)

    input_size = 32
    hidden_sizes = (64, 64)
    output_size = 8
    params = init_mlp_params(k_p, input_size, hidden_sizes, output_size)

    # 1) Default module config (layer_norm=False), f32 MXU, single grid step.
    batch = 8
    x = jax.random.normal(k_x, (batch, input_size), dtype=jnp.float32)
    out = jax.block_until_ready(mlp_forward(x, params, tm=256))
    ref = mlp_reference(x, params)
    assert out.shape == (batch, output_size)
    assert jnp.allclose(out, ref, atol=1e-5, rtol=1e-5), "f32 mismatch vs reference"

    # 2) Larger batch exercising the pipelined batch grid (tail padding,
    #    grid=4 with tm=64) and bf16 MXU inputs with f32 accumulation.
    batch2 = 200
    x2 = jax.random.normal(k_x2, (batch2, input_size), dtype=jnp.float32)
    out2 = jax.block_until_ready(
        mlp_forward(x2, params, tm=64, compute_dtype=jnp.bfloat16))
    ref2 = mlp_reference(x2, params)
    assert out2.shape == (batch2, output_size)
    assert jnp.allclose(out2, ref2, atol=1e-2, rtol=5e-2), "bf16 mismatch vs reference"

    # 3) layer_norm=True with 3 hidden layers: LayerNorm after every hidden
    #    layer except the last, exactly as in the PyTorch module. Center params
    #    are randomized here (module init is zeros) just to exercise the add.
    hidden_sizes3 = (64, 64, 32)
    params3 = init_mlp_params(k_p3, input_size, hidden_sizes3, output_size,
                              b_init_value=0.1, layer_norm=True)
    for i in range(len(hidden_sizes3) - 1):
        params3[f"ln_c{i}"] = 0.05 * jax.random.normal(
            jax.random.fold_in(k_ln, i), (1, hidden_sizes3[i]), dtype=jnp.float32)
    batch3 = 40
    x3 = jax.random.normal(k_x3, (batch3, input_size), dtype=jnp.float32)
    out3 = jax.block_until_ready(
        mlp_forward(x3, params3, layer_norm=True, tm=32))
    ref3 = mlp_reference(x3, params3, layer_norm=True)
    assert out3.shape == (batch3, output_size)
    assert jnp.allclose(out3, ref3, atol=1e-4, rtol=1e-4), \
        "layer_norm mismatch vs reference"

    print("KERNEL_OK")
</pallas_src>

<mosaic_0001>
module attributes {stable_mosaic.version = 11 : i64} {
  func.func @kernel(%arg0: i32, %arg1: memref<8x32xf32, #tpu.memory_space<vmem>>, %arg2: memref<32x64xf32, #tpu.memory_space<vmem>>, %arg3: memref<1x64xf32, #tpu.memory_space<vmem>>, %arg4: memref<64x64xf32, #tpu.memory_space<vmem>>, %arg5: memref<1x64xf32, #tpu.memory_space<vmem>>, %arg6: memref<64x128xf32, #tpu.memory_space<vmem>>, %arg7: memref<1x128xf32, #tpu.memory_space<vmem>>, %arg8: memref<8x128xf32, #tpu.memory_space<vmem>>) attributes {dimension_semantics = [#tpu.dimension_semantics<parallel>], iteration_bounds = array<i64: 1>, scalar_prefetch = 0 : i64, scratch_operands = 0 : i64, tpu.core_type = #tpu.core_type<tc>, window_params = [{transform_indices = @transform_0, window_bounds = array<i64: 8, 32>}, {pipeline_mode = #tpu.pipeline_mode<synchronous>, transform_indices = @transform_1, window_bounds = array<i64: 32, 64>}, {pipeline_mode = #tpu.pipeline_mode<synchronous>, transform_indices = @transform_2, window_bounds = array<i64: 1, 64>}, {pipeline_mode = #tpu.pipeline_mode<synchronous>, transform_indices = @transform_3, window_bounds = array<i64: 64, 64>}, {pipeline_mode = #tpu.pipeline_mode<synchronous>, transform_indices = @transform_4, window_bounds = array<i64: 1, 64>}, {pipeline_mode = #tpu.pipeline_mode<synchronous>, transform_indices = @transform_5, window_bounds = array<i64: 64, 128>}, {pipeline_mode = #tpu.pipeline_mode<synchronous>, transform_indices = @transform_6, window_bounds = array<i64: 1, 128>}, {transform_indices = @transform_7, window_bounds = array<i64: 8, 128>}]} {
    %c0 = arith.constant 0 : index
    %c0_0 = arith.constant 0 : index
    %0 = vector.load %arg1[%c0, %c0_0] : memref<8x32xf32, #tpu.memory_space<vmem>>, vector<8x32xf32>
    %c0_1 = arith.constant 0 : index
    %c0_2 = arith.constant 0 : index
    %1 = vector.load %arg2[%c0_1, %c0_2] : memref<32x64xf32, #tpu.memory_space<vmem>>, vector<32x64xf32>
    %cst = arith.constant dense<0.000000e+00> : vector<8x64xf32>
    %2 = tpu.matmul %0, %1, %cst {dimension_numbers = #tpu.dot_dimension_numbers<[1], [0], [0], [1], [0, 0, 1, 1], [], []>} : vector<8x32xf32>, vector<32x64xf32>, vector<8x64xf32> -> vector<8x64xf32>
    %c0_3 = arith.constant 0 : index
    %c0_4 = arith.constant 0 : index
    %3 = vector.load %arg3[%c0_3, %c0_4] : memref<1x64xf32, #tpu.memory_space<vmem>>, vector<1x64xf32>
    %4 = vector.broadcast %3 : vector<1x64xf32> to vector<8x64xf32>
    %5 = arith.addf %2, %4 : vector<8x64xf32>
    %cst_5 = arith.constant 0.000000e+00 : f32
    %6 = vector.broadcast %cst_5 : f32 to vector<8x64xf32>
    %7 = arith.maximumf %5, %6 : vector<8x64xf32>
    %c0_6 = arith.constant 0 : index
    %c0_7 = arith.constant 0 : index
    %8 = vector.load %arg4[%c0_6, %c0_7] : memref<64x64xf32, #tpu.memory_space<vmem>>, vector<64x64xf32>
    %cst_8 = arith.constant dense<0.000000e+00> : vector<8x64xf32>
    %9 = tpu.matmul %7, %8, %cst_8 {dimension_numbers = #tpu.dot_dimension_numbers<[1], [0], [0], [1], [0, 0, 1, 1], [], []>} : vector<8x64xf32>, vector<64x64xf32>, vector<8x64xf32> -> vector<8x64xf32>
    %c0_9 = arith.constant 0 : index
    %c0_10 = arith.constant 0 : index
    %10 = vector.load %arg5[%c0_9, %c0_10] : memref<1x64xf32, #tpu.memory_space<vmem>>, vector<1x64xf32>
    %11 = vector.broadcast %10 : vector<1x64xf32> to vector<8x64xf32>
    %12 = arith.addf %9, %11 : vector<8x64xf32>
    %cst_11 = arith.constant 0.000000e+00 : f32
    %13 = vector.broadcast %cst_11 : f32 to vector<8x64xf32>
    %14 = arith.maximumf %12, %13 : vector<8x64xf32>
    %c0_12 = arith.constant 0 : index
    %c0_13 = arith.constant 0 : index
    %15 = vector.load %arg6[%c0_12, %c0_13] : memref<64x128xf32, #tpu.memory_space<vmem>>, vector<64x128xf32>
    %cst_14 = arith.constant dense<0.000000e+00> : vector<8x128xf32>
    %16 = tpu.matmul %14, %15, %cst_14 {dimension_numbers = #tpu.dot_dimension_numbers<[1], [0], [0], [1], [0, 0, 1, 1], [], []>} : vector<8x64xf32>, vector<64x128xf32>, vector<8x128xf32> -> vector<8x128xf32>
    %c0_15 = arith.constant 0 : index
    %c0_16 = arith.constant 0 : index
    %17 = vector.load %arg7[%c0_15, %c0_16] : memref<1x128xf32, #tpu.memory_space<vmem>>, vector<1x128xf32>
    %18 = vector.broadcast %17 : vector<1x128xf32> to vector<8x128xf32>
    %19 = arith.addf %16, %18 : vector<8x128xf32>
    %c0_17 = arith.constant 0 : index
    %c0_18 = arith.constant 0 : index
    %20 = vector.load %arg8[%c0_17, %c0_18] : memref<8x128xf32, #tpu.memory_space<vmem>>, vector<8x128xf32>
    tpu.vector_store %arg8[%c0_17, %c0_18], %19 {strides = array<i32>} : memref<8x128xf32, #tpu.memory_space<vmem>>, vector<8x128xf32>,
    return
  }
  func.func @transform_0(%arg0: i32) -> (i32, i32) {
    %c0_i32 = arith.constant 0 : i32
    %c0_i32_0 = arith.constant 0 : i32
    return %arg0, %c0_i32 : i32, i32
  }
  func.func @transform_1(%arg0: i32) -> (i32, i32) {
    %c0_i32 = arith.constant 0 : i32
    %c0_i32_0 = arith.constant 0 : i32
    %c0_i32_1 = arith.constant 0 : i32
    return %c0_i32, %c0_i32_0 : i32, i32
  }
  func.func @transform_2(%arg0: i32) -> (i32, i32) {
    %c0_i32 = arith.constant 0 : i32
    %c0_i32_0 = arith.constant 0 : i32
    %c0_i32_1 = arith.constant 0 : i32
    return %c0_i32, %c0_i32_0 : i32, i32
  }
  func.func @transform_3(%arg0: i32) -> (i32, i32) {
    %c0_i32 = arith.constant 0 : i32
    %c0_i32_0 = arith.constant 0 : i32
    %c0_i32_1 = arith.constant 0 : i32
    return %c0_i32, %c0_i32_0 : i32, i32
  }
  func.func @transform_4(%arg0: i32) -> (i32, i32) {
    %c0_i32 = arith.constant 0 : i32
    %c0_i32_0 = arith.constant 0 : i32
    %c0_i32_1 = arith.constant 0 : i32
    return %c0_i32, %c0_i32_0 : i32, i32
  }
  func.func @transform_5(%arg0: i32) -> (i32, i32) {
    %c0_i32 = arith.constant 0 : i32
    %c0_i32_0 = arith.constant 0 : i32
    %c0_i32_1 = arith.constant 0 : i32
    return %c0_i32, %c0_i32_0 : i32, i32
  }
  func.func @transform_6(%arg0: i32) -> (i32, i32) {
    %c0_i32 = arith.constant 0 : i32
    %c0_i32_0 = arith.constant 0 : i32
    %c0_i32_1 = arith.constant 0 : i32
    return %c0_i32, %c0_i32_0 : i32, i32
  }
  func.func @transform_7(%arg0: i32) -> (i32, i32) {
    %c0_i32 = arith.constant 0 : i32
    %c0_i32_0 = arith.constant 0 : i32
    return %arg0, %c0_i32 : i32, i32
  }
}

</mosaic_0001>

<llo_original>
// kernel: tpu_custom_call.1
$region0: #{tpu_custom_call.1}
  #allocation0 [shape = 'u32[]', space=smem, size = 0x4, offset = 0x4, fixed_abs, tag = 'smem constant byte address 0x4 - core index']
  #allocation1 [shape = 'u32[72,128]{1,0:T(1,128)}', space=vmem, size = 0x9000, scoped, tag = 'internal scratch']
  %s0 = inlined_call_operand.hbm [shape: f32[8,32], index: 0, kind: input, shape index: {}]
  %s1 = inlined_call_operand.hbm [shape: f32[32,64], index: 1, kind: input, shape index: {}]
  %s2 = inlined_call_operand.vmem [shape: f32[1,64], index: 2, kind: input, shape index: {}]
  %s3 = inlined_call_operand.hbm [shape: f32[64,64], index: 3, kind: input, shape index: {}]
  %s4 = inlined_call_operand.vmem [shape: f32[1,64], index: 4, kind: input, shape index: {}]
  %s5 = inlined_call_operand.hbm [shape: f32[64,128], index: 5, kind: input, shape index: {}]
  %s6 = inlined_call_operand.vmem [shape: f32[1,128], index: 6, kind: input, shape index: {}]
  %s7 = inlined_call_operand.hbm [shape: f32[8,128], index: 7, kind: output, shape index: {}]
  %s8 = sld [smem:[#allocation0]]
  $region54: #{tpu_custom_call.1} parent=0
    _
  %s10 = ssub.s32 1, %s8
  %s11 = scalar_select 0, %s10, %s8
  $region1: #{tpu_custom_call.1} parent=0
    #allocation2 [shape = 'u8[4096]{0}', space=vmem, size = 0x1000, scoped, tag = 'input window, operand 0, single buffered']
    #allocation3 [shape = 's32[1]{0}', space=sflag, size = 0x4, scoped, tag = 'scoped memory for tpu_custom_call.1']
    #allocation4 [shape = 's32[1]{0}', space=sflag, size = 0x4, scoped, tag = 'scoped memory for tpu_custom_call.1']
    #allocation5 [shape = 'u8[16384]{0}', space=vmem, size = 0x4000, scoped, tag = 'input window, operand 1, single buffered']
    #allocation6 [shape = 's32[1]{0}', space=sflag, size = 0x4, scoped, tag = 'scoped memory for tpu_custom_call.1']
    #allocation7 [shape = 'u8[32768]{0}', space=vmem, size = 0x8000, scoped, tag = 'input window, operand 3, single buffered']
    #allocation8 [shape = 'u8[32768]{0}', space=vmem, size = 0x8000, scoped, tag = 'input window, operand 5, single buffered']
    #allocation9 [shape = 's32[1]{0}', space=sflag, size = 0x4, scoped, tag = 'scoped memory for tpu_custom_call.1']
    #allocation10 [shape = 'u8[4096]{0}', space=vmem, size = 0x1000, scoped, tag = 'output window, operand 0, single buffered']
    %12 = vsyncpa [#allocation3], 0
    %13 = vsyncpa [#allocation6], 0
    %14 = vsyncpa [#allocation9], 0
    %15 = vsyncpa [#allocation4], 0
    // Predicated region
    $region2: #{tpu_custom_call.1} parent=1 // pred_check
      _
    $region3: #{tpu_custom_call.1} parent=1 // pred_check_branch
      %17 = sbr.rel (0) target = $region5
    $region4: #{tpu_custom_call.1} parent=1 // pred_region
      %19 = vsyncadd [#allocation3], 0
      %s21 = sshll.u32 %s0, 4
      %s22 = int_to_ptr.hbm [resolvable:$true] %s21
      %s23 = sshll.u32 [#allocation2], 4
      %s24 = int_to_ptr.vmem [resolvable:$true] %s23
      %26 = dma.hbm_to_vmem [thread:$0]  %s22, 128, %s24, [#allocation3]
    $region5: #{tpu_custom_call.1} parent=1 // pred_fallthru
      _
    // Predicated region
    $region6: #{tpu_custom_call.1} parent=1 // pred_check
      _
    $region7: #{tpu_custom_call.1} parent=1 // pred_check_branch
      %28 = sbr.rel (0) target = $region9
    $region8: #{tpu_custom_call.1} parent=1 // pred_region
      %30 = vsyncadd [#allocation6], 0
      %s31 = sshll.u32 %s1, 4
      %s32 = int_to_ptr.hbm [resolvable:$true] %s31
      %s33 = sshll.u32 [#allocation5], 4
      %s34 = int_to_ptr.vmem [resolvable:$true] %s33
      %39 = dma.hbm_to_vmem [thread:$0]  %s32, 512, %s34, [#allocation6], 128, 128, 8
    $region9: #{tpu_custom_call.1} parent=1 // pred_fallthru
      _
    // Predicated region
    $region10: #{tpu_custom_call.1} parent=1 // pred_check
      _
    $region11: #{tpu_custom_call.1} parent=1 // pred_check_branch
      %41 = sbr.rel (0) target = $region13
    $region12: #{tpu_custom_call.1} parent=1 // pred_region
      _
    $region13: #{tpu_custom_call.1} parent=1 // pred_fallthru
      _
    // Predicated region
    $region14: #{tpu_custom_call.1} parent=1 // pred_check
      _
    $region15: #{tpu_custom_call.1} parent=1 // pred_check_branch
      %43 = sbr.rel (0) target = $region17
    $region16: #{tpu_custom_call.1} parent=1 // pred_region
      %45 = vsyncadd [#allocation6], 0
      %s46 = sshll.u32 %s3, 4
      %s47 = int_to_ptr.hbm [resolvable:$true] %s46
      %s48 = sshll.u32 [#allocation7], 4
      %s49 = int_to_ptr.vmem [resolvable:$true] %s48
      %54 = dma.hbm_to_vmem [thread:$0]  %s47, 1024, %s49, [#allocation6], 128, 128, 8
    $region17: #{tpu_custom_call.1} parent=1 // pred_fallthru
      _
    // Predicated region
    $region18: #{tpu_custom_call.1} parent=1 // pred_check
      _
    $region19: #{tpu_custom_call.1} parent=1 // pred_check_branch
      %56 = sbr.rel (0) target = $region21
    $region20: #{tpu_custom_call.1} parent=1 // pred_region
      _
    $region21: #{tpu_custom_call.1} parent=1 // pred_fallthru
      _
    // Predicated region
    $region22: #{tpu_custom_call.1} parent=1 // pred_check
      _
    $region23: #{tpu_custom_call.1} parent=1 // pred_check_branch
      %58 = sbr.rel (0) target = $region25
    $region24: #{tpu_custom_call.1} parent=1 // pred_region
      %60 = vsyncadd [#allocation9], 0
      %s61 = sshll.u32 %s5, 4
      %s62 = int_to_ptr.hbm [resolvable:$true] %s61
      %s63 = sshll.u32 [#allocation8], 4
      %s64 = int_to_ptr.vmem [resolvable:$true] %s63
      %69 = dma.hbm_to_vmem [thread:$0]  %s62, 1024, %s64, [#allocation9], 128, 128, 8
    $region25: #{tpu_custom_call.1} parent=1 // pred_fallthru
      _
    // Predicated region
    $region26: #{tpu_custom_call.1} parent=1 // pred_check
      _
    $region27: #{tpu_custom_call.1} parent=1 // pred_check_branch
      %71 = sbr.rel (0) target = $region29
    $region28: #{tpu_custom_call.1} parent=1 // pred_region
      _
    $region29: #{tpu_custom_call.1} parent=1 // pred_fallthru
      _
    // Predicated region
    $region30: #{tpu_custom_call.1} parent=1 // pred_check
      _
    $region31: #{tpu_custom_call.1} parent=1 // pred_check_branch
      %73 = sbr.rel (0) target = $region33
    $region32: #{tpu_custom_call.1} parent=1 // pred_region
      %75 = dma.done [#allocation3], 128
    $region33: #{tpu_custom_call.1} parent=1 // pred_fallthru
      _
    // Predicated region
    $region34: #{tpu_custom_call.1} parent=1 // pred_check
      _
    $region35: #{tpu_custom_call.1} parent=1 // pred_check_branch
      %77 = sbr.rel (0) target = $region37
    $region36: #{tpu_custom_call.1} parent=1 // pred_region
      %79 = dma.done [#allocation6], 512
    $region37: #{tpu_custom_call.1} parent=1 // pred_fallthru
      _
    // Predicated region
    $region38: #{tpu_custom_call.1} parent=1 // pred_check
      _
    $region39: #{tpu_custom_call.1} parent=1 // pred_check_branch
      %81 = sbr.rel (0) target = $region41
    $region40: #{tpu_custom_call.1} parent=1 // pred_region
      %83 = dma.done [#allocation6], 1024
    $region41: #{tpu_custom_call.1} parent=1 // pred_fallthru
      _
    // Predicated region
    $region42: #{tpu_custom_call.1} parent=1 // pred_check
      _
    $region43: #{tpu_custom_call.1} parent=1 // pred_check_branch
      %85 = sbr.rel (0) target = $region45
    $region44: #{tpu_custom_call.1} parent=1 // pred_region
      %87 = dma.done [#allocation9], 1024
    $region45: #{tpu_custom_call.1} parent=1 // pred_fallthru
      _
    %v88 = vld [vmem:[#allocation2] sm:$0xff]
    %v89 = vld [vmem:[#allocation5] sm:$0xff]
    %v90 = vld [vmem:[#allocation5 + $0x8] sm:$0xff]
    %v91 = vld [vmem:[#allocation5 + $0x10] sm:$0xff]
    %v92 = vld [vmem:[#allocation5 + $0x18] sm:$0xff]
    %v93 = vld [vmem:[%s2] sm:$0x1]
    %v95 = vperm.slane %v93, 0
    %vm97 = vcmask 261120
    %v99 = vsel %vm97, %v88, 0
    %101 = vmatpush.msra.mxu0 0.0
    %102 = vmatpush.msra.mxu0 0.0
    %103 = vmatpush.msra.mxu0 0.0
    %104 = vmatpush.msra.mxu0 0.0
    %105 = vmatpush.msra.mxu0 0.0
    %106 = vmatpush.msra.mxu0 0.0
    %107 = vmatpush.msra.mxu0 0.0
    %108 = vmatpush.msra.mxu0 0.0
    %109 = vmatpush.msra.mxu0 0.0
    %110 = vmatpush.msra.mxu0 0.0
    %111 = vmatpush.msra.mxu0 0.0
    %112 = vmatpush.msra.mxu0 0.0
    %113 = vmatpush.msra.mxu0 %v92
    %114 = vmatpush.msra.mxu0 %v91
    %115 = vmatpush.msra.mxu0 %v90
    %116 = vmatpush.msra.mxu0 %v89
    %117 = vmatmul.f32.gmra.mxu0 %v99
    %v118 = vpop.f32.mrf.mxu0
    %v119 = vadd.f32 %v95, %v118
    %120 = vdwg.mxu0
    %v121 = vmax.f32 %v119, 0.0
    %v122 = vld [vmem:[#allocation7] sm:$0xff]
    %v123 = vld [vmem:[#allocation7 + $0x8] sm:$0xff]
    %v124 = vld [vmem:[#allocation7 + $0x10] sm:$0xff]
    %v125 = vld [vmem:[#allocation7 + $0x18] sm:$0xff]
    %v126 = vld [vmem:[#allocation7 + $0x20] sm:$0xff]
    %v127 = vld [vmem:[#allocation7 + $0x28] sm:$0xff]
    %v128 = vld [vmem:[#allocation7 + $0x30] sm:$0xff]
    %v129 = vld [vmem:[#allocation7 + $0x38] sm:$0xff]
    %v130 = vld [vmem:[%s4] sm:$0x1]
    %v132 = vperm.slane %v130, 0
    %vm134 = vcmask 523264
    %v136 = vsel %vm134, %v121, 0
    %138 = vmatpush.msra.mxu0 0.0
    %139 = vmatpush.msra.mxu0 0.0
    %140 = vmatpush.msra.mxu0 0.0
    %141 = vmatpush.msra.mxu0 0.0
    %142 = vmatpush.msra.mxu0 0.0
    %143 = vmatpush.msra.mxu0 0.0
    %144 = vmatpush.msra.mxu0 0.0
    %145 = vmatpush.msra.mxu0 0.0
    %146 = vmatpush.msra.mxu0 %v129
    %147 = vmatpush.msra.mxu0 %v128
    %148 = vmatpush.msra.mxu0 %v127
    %149 = vmatpush.msra.mxu0 %v126
    %150 = vmatpush.msra.mxu0 %v125
    %151 = vmatpush.msra.mxu0 %v124
    %152 = vmatpush.msra.mxu0 %v123
    %153 = vmatpush.msra.mxu0 %v122
    %154 = vmatmul.f32.gmra.mxu0 %v136
    %v155 = vpop.f32.mrf.mxu0
    %v156 = vadd.f32 %v132, %v155
    %157 = vdwg.mxu0
    %v158 = vmax.f32 %v156, 0.0
    %v159 = vld [vmem:[#allocation8] sm:$0xff]
    %v160 = vld [vmem:[#allocation8 + $0x8] sm:$0xff]
    %v161 = vld [vmem:[#allocation8 + $0x10] sm:$0xff]
    %v162 = vld [vmem:[#allocation8 + $0x18] sm:$0xff]
    %v163 = vld [vmem:[#allocation8 + $0x20] sm:$0xff]
    %v164 = vld [vmem:[#allocation8 + $0x28] sm:$0xff]
    %v165 = vld [vmem:[#allocation8 + $0x30] sm:$0xff]
    %v166 = vld [vmem:[#allocation8 + $0x38] sm:$0xff]
    %v167 = vld [vmem:[%s6] sm:$0x1]
    %v169 = vperm.slane %v167, 0
    %v172 = vsel %vm134, %v158, 0
    %174 = vmatpush.msra.mxu0 0.0
    %175 = vmatpush.msra.mxu0 0.0
    %176 = vmatpush.msra.mxu0 0.0
    %177 = vmatpush.msra.mxu0 0.0
    %178 = vmatpush.msra.mxu0 0.0
    %179 = vmatpush.msra.mxu0 0.0
    %180 = vmatpush.msra.mxu0 0.0
    %181 = vmatpush.msra.mxu0 0.0
    %182 = vmatpush.msra.mxu0 %v166
    %183 = vmatpush.msra.mxu0 %v165
    %184 = vmatpush.msra.mxu0 %v164
    %185 = vmatpush.msra.mxu0 %v163
    %186 = vmatpush.msra.mxu0 %v162
    %187 = vmatpush.msra.mxu0 %v161
    %188 = vmatpush.msra.mxu0 %v160
    %189 = vmatpush.msra.mxu0 %v159
    %190 = vmatmul.f32.gmra.mxu0 %v172
    %v191 = vpop.f32.mrf.mxu0
    %v192 = vadd.f32 %v169, %v191
    %193 = vdwg.mxu0
    %194 = vst [vmem:[#allocation10] sm:$0xff] %v192
    // Predicated region
    $region46: #{tpu_custom_call.1} parent=1 // pred_check
      _
    $region47: #{tpu_custom_call.1} parent=1 // pred_check_branch
      %196 = sbr.rel (0) target = $region49
    $region48: #{tpu_custom_call.1} parent=1 // pred_region
      %198 = vsyncadd [#allocation4], 0
      %s200 = sshll.u32 [#allocation10], 4
      %s201 = int_to_ptr.vmem [resolvable:$true] %s200
      %s202 = sshll.u32 %s7, 4
      %s203 = int_to_ptr.hbm [resolvable:$true] %s202
      %205 = dma.vmem_to_hbm [thread:$0]  %s201, 128, %s203, [#allocation4]
    $region49: #{tpu_custom_call.1} parent=1 // pred_fallthru
      _
    // Predicated region
    $region50: #{tpu_custom_call.1} parent=1 // pred_check
      _
    $region51: #{tpu_custom_call.1} parent=1 // pred_check_branch
      %207 = sbr.rel (0) target = $region53
    $region52: #{tpu_custom_call.1} parent=1 // pred_region
      %209 = dma.done [#allocation4], 128
    $region53: #{tpu_custom_call.1} parent=1 // pred_fallthru
      _
    %210 = vsyncpa [#allocation3], 1
    %211 = vsyncpa [#allocation6], 1
    %212 = vsyncpa [#allocation9], 1
    %213 = vsyncpa [#allocation4], 1

</llo_original>
